<compile_context>
chip_gen: v7x
topology: tpu7x:2x2x1
jax: 0.10.0
libtpu: 0.0.40
codegen_flags: <defaults>
</compile_context>

<pallas_src>
import functools

import jax
import jax.numpy as jnp
import numpy as np
from jax.experimental import pallas as pl
from jax.experimental.pallas import tpu as pltpu


def _mask_dice_kernel(pred_ref, target_ref, dice_ref, inter_acc, union_acc, *, smooth):
    # pred_ref/target_ref: (TR, TL) native dtype; dice_ref: (TR, 1) f32
    # inter_acc/union_acc: (TR, 128) f32 VMEM scratch, persistent across the L grid axis.
    k = pl.program_id(1)

    @pl.when(k == 0)
    def _():
        inter_acc[...] = jnp.zeros_like(inter_acc)
        union_acc[...] = jnp.zeros_like(union_acc)

    tr, tl = pred_ref.shape
    n_groups = tl // 128

    # Lane-group accumulation straight into the VMEM scratch refs: no register
    # accumulator lives across loop iterations, so the static unroll cannot spill.
    # All lane work is VPU adds/muls + one EUP tanh per vreg; zero XLU in the hot loop.
    for g in range(n_groups):                        # static unroll (<= 16 iters)
        sl = slice(g * 128, (g + 1) * 128)
        x = pred_ref[:, sl].astype(jnp.float32)
        p = 0.5 * jnp.tanh(0.5 * x) + 0.5            # single-EUP sigmoid
        t = target_ref[:, sl].astype(jnp.float32)
        inter_acc[...] += p * t
        union_acc[...] += p * p + t

    @pl.when(k == pl.num_programs(1) - 1)
    def _():
        # Single cross-lane (XLU) reduce per row block, then dice coefficient.
        inter_s = jnp.sum(inter_acc[...], axis=1, keepdims=True)   # (TR, 1)
        union_s = jnp.sum(union_acc[...], axis=1, keepdims=True)   # (TR, 1)
        dice_ref[...] = (2.0 * inter_s + smooth) * pl.reciprocal(
            union_s + smooth, approx=False)


def _round_up(x, m):
    return (x + m - 1) // m * m


def _sublane_multiple(dtype):
    # f32 -> 8, bf16/f16 -> 16, int8/bool -> 32 (packed-dtype sublane tiling).
    itemsize = jnp.dtype(dtype).itemsize
    return 8 * max(1, 4 // itemsize)


def mask_dice_loss(pred, target, *, loss_weight=1.0, smooth=1e-5):
    """pred: float [B, N, H, W] logits; target: {0,1} masks [B, N, H, W] (any numeric dtype).

    Matches: loss_weight * (1 - mean_{b,n}( (2*sum(sig(p)*t) + s) / (sum(sig(p)^2) + sum(t) + s) )).
    For best performance ship pred in bf16 and target in int8/bool; the kernel consumes
    native dtypes and the f32 path is purely HBM-bandwidth bound.
    """
    b, n, h, w = pred.shape
    R, L = b * n, h * w

    # Native dtypes straight into the kernel (no wrapper upcast -> no extra HBM pass).
    pred2 = pred.reshape(R, L)
    tgt2 = target.reshape(R, L)

    # Tile selection: lane axis multiples of 128, row axis multiples of the packed
    # sublane tile.  Row tile targets ceil(R/2) so the "parallel" row axis yields >= 2
    # blocks whenever possible (v7x megacore split); caps keep 2 inputs x 2 pipeline
    # buffers well inside the scoped-VMEM defaults on all generations.
    sub = max(_sublane_multiple(pred2.dtype), _sublane_multiple(tgt2.dtype))
    TL = min(2048, _round_up(L, 128))
    half_rows = max(1, -(-R // 2))                    # ceil(R / 2)
    TR = min(256, _round_up(half_rows, sub))
    L_pad = _round_up(L, TL)
    R_pad = _round_up(R, TR)

    if (R_pad, L_pad) != (R, L):
        # Pad pred with a large negative logit (sigmoid -> 0) clamped to the dtype's
        # finite range (fp8-safe); target padded with 0 so padded lanes contribute
        # nothing.  Padded rows are sliced off after the kernel.
        pad_val = -1e4
        if jnp.issubdtype(pred2.dtype, jnp.floating):
            pad_val = max(pad_val, float(jnp.finfo(pred2.dtype).min) / 4.0)
        pred2 = jnp.pad(pred2, ((0, R_pad - R), (0, L_pad - L)), constant_values=pad_val)
        tgt2 = jnp.pad(tgt2, ((0, R_pad - R), (0, L_pad - L)), constant_values=0)

    grid = (R_pad // TR, L_pad // TL)
    kernel = functools.partial(_mask_dice_kernel, smooth=float(smooth))

    in_bytes = (pred2.size * jnp.dtype(pred2.dtype).itemsize
                + tgt2.size * jnp.dtype(tgt2.dtype).itemsize)
    cost = pl.CostEstimate(
        flops=6 * R_pad * L_pad,
        transcendentals=R_pad * L_pad,          # one tanh per element
        bytes_accessed=in_bytes + R_pad * 4,
    )

    dice = pl.pallas_call(
        kernel,
        out_shape=jax.ShapeDtypeStruct((R_pad, 1), jnp.float32),
        grid_spec=pltpu.PrefetchScalarGridSpec(
            num_scalar_prefetch=0,
            grid=grid,
            in_specs=[
                pl.BlockSpec((TR, TL), lambda i, k: (i, k)),
                pl.BlockSpec((TR, TL), lambda i, k: (i, k)),
            ],
            out_specs=pl.BlockSpec((TR, 1), lambda i, k: (i, 0)),
            scratch_shapes=[
                pltpu.VMEM((TR, 128), jnp.float32),   # intersection partials
                pltpu.VMEM((TR, 128), jnp.float32),   # union partials
            ],
        ),
        compiler_params=pltpu.CompilerParams(
            dimension_semantics=("parallel", "arbitrary"),
        ),
        cost_estimate=cost,
    )(pred2, tgt2)

    # Mean over the B*N true rows only (padded rows excluded by slicing).
    return loss_weight * (1.0 - jnp.sum(dice[:R, 0]) / R)


def _reference(pred, target, loss_weight=1.0, smooth=1e-5):
    b, n = pred.shape[:2]
    p = jax.nn.sigmoid(pred.reshape(b, n, -1).astype(jnp.float32))
    t = target.reshape(b, n, -1).astype(jnp.float32)
    inter = jnp.sum(p * t, axis=2)
    union = jnp.sum(p * p, axis=2) + jnp.sum(t, axis=2)
    dice = (2.0 * inter + smooth) / (union + smooth)
    return loss_weight * (1.0 - jnp.mean(dice))


if __name__ == "__main__":
    key = jax.random.PRNGKey(0)
    LOSS_WEIGHT = 1.0

    # --- check 1: small aligned f32 problem (grid degenerates to (1, 1)) ---
    k1, k2, key = jax.random.split(key, 3)
    pred = jax.random.normal(k1, (2, 4, 16, 16), dtype=jnp.float32)
    target = (jax.random.uniform(k2, (2, 4, 16, 16)) > 0.5).astype(jnp.float32)
    out = jax.block_until_ready(mask_dice_loss(pred, target, loss_weight=LOSS_WEIGHT))
    ref = jax.block_until_ready(_reference(pred, target, loss_weight=LOSS_WEIGHT))
    assert np.allclose(np.asarray(out), np.asarray(ref), rtol=1e-5, atol=1e-6), (out, ref)

    # --- check 2: multi-tile reduction axis (L = 4096 -> 2 L-tiles, accumulator path) ---
    k1, k2, key = jax.random.split(key, 3)
    pred = jax.random.normal(k1, (2, 8, 64, 64), dtype=jnp.float32)
    target = (jax.random.uniform(k2, (2, 8, 64, 64)) > 0.5).astype(jnp.float32)
    out = jax.block_until_ready(mask_dice_loss(pred, target, loss_weight=LOSS_WEIGHT))
    ref = jax.block_until_ready(_reference(pred, target, loss_weight=LOSS_WEIGHT))
    assert np.allclose(np.asarray(out), np.asarray(ref), rtol=1e-5, atol=1e-6), (out, ref)

    # --- check 3: native narrow dtypes + non-aligned shapes (padding + masking path) ---
    k1, k2, key = jax.random.split(key, 3)
    pred = jax.random.normal(k1, (1, 3, 15, 15), dtype=jnp.bfloat16)
    target = (jax.random.uniform(k2, (1, 3, 15, 15)) > 0.5).astype(jnp.int8)
    out = jax.block_until_ready(mask_dice_loss(pred, target, loss_weight=LOSS_WEIGHT))
    ref = jax.block_until_ready(_reference(pred, target, loss_weight=LOSS_WEIGHT))
    assert np.allclose(np.asarray(out), np.asarray(ref), rtol=1e-5, atol=1e-6), (out, ref)

    # --- check 4: row grid >= 2 (megacore split path) + padded rows ---
    k1, k2, key = jax.random.split(key, 3)
    pred = jax.random.normal(k1, (2, 12, 32, 32), dtype=jnp.float32)
    target = (jax.random.uniform(k2, (2, 12, 32, 32)) > 0.5).astype(jnp.float32)
    out = jax.block_until_ready(mask_dice_loss(pred, target, loss_weight=LOSS_WEIGHT))
    ref = jax.block_until_ready(_reference(pred, target, loss_weight=LOSS_WEIGHT))
    assert np.allclose(np.asarray(out), np.asarray(ref), rtol=1e-5, atol=1e-6), (out, ref)

    print("KERNEL_OK")
</pallas_src>

<mosaic_0001>
module attributes {stable_mosaic.version = 11 : i64} {
  func.func @_mask_dice_kernel(%arg0: i32, %arg1: i32, %arg2: memref<8x256xf32, #tpu.memory_space<vmem>>, %arg3: memref<8x256xf32, #tpu.memory_space<vmem>>, %arg4: memref<8x1xf32, #tpu.memory_space<vmem>>, %arg5: memref<8x128xf32, #tpu.memory_space<vmem>>, %arg6: memref<8x128xf32, #tpu.memory_space<vmem>>) attributes {dimension_semantics = [#tpu.dimension_semantics<parallel>, #tpu.dimension_semantics<arbitrary>], iteration_bounds = array<i64: 1, 1>, scalar_prefetch = 0 : i64, scratch_operands = 2 : i64, tpu.core_type = #tpu.core_type<tc>, window_params = [{transform_indices = @transform_0, window_bounds = array<i64: 8, 256>}, {transform_indices = @transform_1, window_bounds = array<i64: 8, 256>}, {transform_indices = @transform_2, window_bounds = array<i64: 8, 1>}]} {
    %c0_i32 = arith.constant 0 : i32
    %0 = arith.cmpi eq, %arg1, %c0_i32 : i32
    %1 = arith.extui %0 : i1 to i32
    %c0_i32_0 = arith.constant 0 : i32
    %2 = arith.cmpi ne, %1, %c0_i32_0 : i32
    scf.if %2 {
      %cst_30 = arith.constant 0.000000e+00 : f32
      %42 = vector.broadcast %cst_30 : f32 to vector<8x128xf32>
      %c0_31 = arith.constant 0 : index
      %c0_32 = arith.constant 0 : index
      %43 = vector.load %arg5[%c0_31, %c0_32] : memref<8x128xf32, #tpu.memory_space<vmem>>, vector<8x128xf32>
      tpu.vector_store %arg5[%c0_31, %c0_32], %42 {strides = array<i32>} : memref<8x128xf32, #tpu.memory_space<vmem>>, vector<8x128xf32>,
      %cst_33 = arith.constant 0.000000e+00 : f32
      %44 = vector.broadcast %cst_33 : f32 to vector<8x128xf32>
      %c0_34 = arith.constant 0 : index
      %c0_35 = arith.constant 0 : index
      %45 = vector.load %arg6[%c0_34, %c0_35] : memref<8x128xf32, #tpu.memory_space<vmem>>, vector<8x128xf32>
      tpu.vector_store %arg6[%c0_34, %c0_35], %44 {strides = array<i32>} : memref<8x128xf32, #tpu.memory_space<vmem>>, vector<8x128xf32>,
    } else {
    }
    %c0 = arith.constant 0 : index
    %c0_1 = arith.constant 0 : index
    %3 = vector.load %arg2[%c0, %c0_1] : memref<8x256xf32, #tpu.memory_space<vmem>>, vector<8x128xf32>
    %cst = arith.constant 5.000000e-01 : f32
    %4 = vector.broadcast %cst : f32 to vector<8x128xf32>
    %5 = arith.mulf %4, %3 : vector<8x128xf32>
    %6 = math.tanh %5 : vector<8x128xf32>
    %cst_2 = arith.constant 5.000000e-01 : f32
    %7 = vector.broadcast %cst_2 : f32 to vector<8x128xf32>
    %8 = arith.mulf %7, %6 : vector<8x128xf32>
    %cst_3 = arith.constant 5.000000e-01 : f32
    %9 = vector.broadcast %cst_3 : f32 to vector<8x128xf32>
    %10 = arith.addf %8, %9 : vector<8x128xf32>
    %c0_4 = arith.constant 0 : index
    %c0_5 = arith.constant 0 : index
    %11 = vector.load %arg3[%c0_4, %c0_5] : memref<8x256xf32, #tpu.memory_space<vmem>>, vector<8x128xf32>
    %c0_6 = arith.constant 0 : index
    %c0_7 = arith.constant 0 : index
    %12 = vector.load %arg5[%c0_6, %c0_7] : memref<8x128xf32, #tpu.memory_space<vmem>>, vector<8x128xf32>
    %13 = arith.mulf %10, %11 : vector<8x128xf32>
    %14 = arith.addf %12, %13 : vector<8x128xf32>
    %c0_8 = arith.constant 0 : index
    %c0_9 = arith.constant 0 : index
    %15 = vector.load %arg5[%c0_8, %c0_9] : memref<8x128xf32, #tpu.memory_space<vmem>>, vector<8x128xf32>
    tpu.vector_store %arg5[%c0_8, %c0_9], %14 {strides = array<i32>} : memref<8x128xf32, #tpu.memory_space<vmem>>, vector<8x128xf32>,
    %c0_10 = arith.constant 0 : index
    %c0_11 = arith.constant 0 : index
    %16 = vector.load %arg6[%c0_10, %c0_11] : memref<8x128xf32, #tpu.memory_space<vmem>>, vector<8x128xf32>
    %17 = arith.mulf %10, %10 : vector<8x128xf32>
    %18 = arith.addf %17, %11 : vector<8x128xf32>
    %19 = arith.addf %16, %18 : vector<8x128xf32>
    %c0_12 = arith.constant 0 : index
    %c0_13 = arith.constant 0 : index
    %20 = vector.load %arg6[%c0_12, %c0_13] : memref<8x128xf32, #tpu.memory_space<vmem>>, vector<8x128xf32>
    tpu.vector_store %arg6[%c0_12, %c0_13], %19 {strides = array<i32>} : memref<8x128xf32, #tpu.memory_space<vmem>>, vector<8x128xf32>,
    %c0_14 = arith.constant 0 : index
    %c128 = arith.constant 128 : index
    %21 = vector.load %arg2[%c0_14, %c128] : memref<8x256xf32, #tpu.memory_space<vmem>>, vector<8x128xf32>
    %cst_15 = arith.constant 5.000000e-01 : f32
    %22 = vector.broadcast %cst_15 : f32 to vector<8x128xf32>
    %23 = arith.mulf %22, %21 : vector<8x128xf32>
    %24 = math.tanh %23 : vector<8x128xf32>
    %cst_16 = arith.constant 5.000000e-01 : f32
    %25 = vector.broadcast %cst_16 : f32 to vector<8x128xf32>
    %26 = arith.mulf %25, %24 : vector<8x128xf32>
    %cst_17 = arith.constant 5.000000e-01 : f32
    %27 = vector.broadcast %cst_17 : f32 to vector<8x128xf32>
    %28 = arith.addf %26, %27 : vector<8x128xf32>
    %c0_18 = arith.constant 0 : index
    %c128_19 = arith.constant 128 : index
    %29 = vector.load %arg3[%c0_18, %c128_19] : memref<8x256xf32, #tpu.memory_space<vmem>>, vector<8x128xf32>
    %c0_20 = arith.constant 0 : index
    %c0_21 = arith.constant 0 : index
    %30 = vector.load %arg5[%c0_20, %c0_21] : memref<8x128xf32, #tpu.memory_space<vmem>>, vector<8x128xf32>
    %31 = arith.mulf %28, %29 : vector<8x128xf32>
    %32 = arith.addf %30, %31 : vector<8x128xf32>
    %c0_22 = arith.constant 0 : index
    %c0_23 = arith.constant 0 : index
    %33 = vector.load %arg5[%c0_22, %c0_23] : memref<8x128xf32, #tpu.memory_space<vmem>>, vector<8x128xf32>
    tpu.vector_store %arg5[%c0_22, %c0_23], %32 {strides = array<i32>} : memref<8x128xf32, #tpu.memory_space<vmem>>, vector<8x128xf32>,
    %c0_24 = arith.constant 0 : index
    %c0_25 = arith.constant 0 : index
    %34 = vector.load %arg6[%c0_24, %c0_25] : memref<8x128xf32, #tpu.memory_space<vmem>>, vector<8x128xf32>
    %35 = arith.mulf %28, %28 : vector<8x128xf32>
    %36 = arith.addf %35, %29 : vector<8x128xf32>
    %37 = arith.addf %34, %36 : vector<8x128xf32>
    %c0_26 = arith.constant 0 : index
    %c0_27 = arith.constant 0 : index
    %38 = vector.load %arg6[%c0_26, %c0_27] : memref<8x128xf32, #tpu.memory_space<vmem>>, vector<8x128xf32>
    tpu.vector_store %arg6[%c0_26, %c0_27], %37 {strides = array<i32>} : memref<8x128xf32, #tpu.memory_space<vmem>>, vector<8x128xf32>,
    %c0_i32_28 = arith.constant 0 : i32
    %39 = arith.cmpi eq, %arg1, %c0_i32_28 : i32
    %40 = arith.extui %39 : i1 to i32
    %c0_i32_29 = arith.constant 0 : i32
    %41 = arith.cmpi ne, %40, %c0_i32_29 : i32
    scf.if %41 {
      %c0_30 = arith.constant 0 : index
      %c0_31 = arith.constant 0 : index
      %42 = vector.load %arg5[%c0_30, %c0_31] : memref<8x128xf32, #tpu.memory_space<vmem>>, vector<8x128xf32>
      %cst_32 = arith.constant dense<0.000000e+00> : vector<8xf32>
      %43 = vector.multi_reduction <add>, %42, %cst_32 [1] : vector<8x128xf32> to vector<8xf32>
      %44 = vector.shape_cast %43 : vector<8xf32> to vector<8x1xf32>
      %c0_33 = arith.constant 0 : index
      %c0_34 = arith.constant 0 : index
      %45 = vector.load %arg6[%c0_33, %c0_34] : memref<8x128xf32, #tpu.memory_space<vmem>>, vector<8x128xf32>
      %cst_35 = arith.constant dense<0.000000e+00> : vector<8xf32>
      %46 = vector.multi_reduction <add>, %45, %cst_35 [1] : vector<8x128xf32> to vector<8xf32>
      %47 = vector.shape_cast %46 : vector<8xf32> to vector<8x1xf32>
      %cst_36 = arith.constant 2.000000e+00 : f32
      %48 = vector.broadcast %cst_36 : f32 to vector<8x1xf32>
      %49 = arith.mulf %48, %44 : vector<8x1xf32>
      %cst_37 = arith.constant 9.99999974E-6 : f32
      %50 = vector.broadcast %cst_37 : f32 to vector<8x1xf32>
      %51 = arith.addf %49, %50 : vector<8x1xf32>
      %cst_38 = arith.constant 9.99999974E-6 : f32
      %52 = vector.broadcast %cst_38 : f32 to vector<8x1xf32>
      %53 = arith.addf %47, %52 : vector<8x1xf32>
      %54 = tpu.reciprocal %53 : vector<8x1xf32> -> vector<8x1xf32>
      %55 = arith.mulf %51, %54 : vector<8x1xf32>
      %c0_39 = arith.constant 0 : index
      %c0_40 = arith.constant 0 : index
      %56 = vector.load %arg4[%c0_39, %c0_40] : memref<8x1xf32, #tpu.memory_space<vmem>>, vector<8x1xf32>
      tpu.vector_store %arg4[%c0_39, %c0_40], %55 {strides = array<i32>} : memref<8x1xf32, #tpu.memory_space<vmem>>, vector<8x1xf32>,
    } else {
    }
    return
  }
  func.func @transform_0(%arg0: i32, %arg1: i32) -> (i32, i32) {
    %c0_i32 = arith.constant 0 : i32
    return %arg0, %arg1 : i32, i32
  }
  func.func @transform_1(%arg0: i32, %arg1: i32) -> (i32, i32) {
    %c0_i32 = arith.constant 0 : i32
    return %arg0, %arg1 : i32, i32
  }
  func.func @transform_2(%arg0: i32, %arg1: i32) -> (i32, i32) {
    %c0_i32 = arith.constant 0 : i32
    %c0_i32_0 = arith.constant 0 : i32
    return %arg0, %c0_i32 : i32, i32
  }
}

</mosaic_0001>

<llo_original>
// kernel: tpu_custom_call.1
$region0: #{tpu_custom_call.1}
  #allocation0 [shape = 'u32[]', space=smem, size = 0x4, offset = 0x4, fixed_abs, tag = 'smem constant byte address 0x4 - core index']
  #allocation1 [shape = 'u32[144,128]{1,0:T(1,128)}', space=vmem, size = 0x12000, scoped, tag = 'internal scratch']
  #allocation2 [shape = 'f32[8,128]{1,0:T(8,128)}', space=vmem, size = 0x1000, scoped, tag = 'scratch operand']
  #allocation3 [shape = 'f32[8,128]{1,0:T(8,128)}', space=vmem, size = 0x1000, scoped, tag = 'scratch operand']
  %s0 = inlined_call_operand.hbm [shape: f32[8,256], index: 0, kind: input, shape index: {}]
  %s1 = inlined_call_operand.hbm [shape: f32[8,256], index: 1, kind: input, shape index: {}]
  %s2 = inlined_call_operand.vmem [shape: f32[8,1], index: 2, kind: output, shape index: {}]
  %s3 = sld [smem:[#allocation0]]
  $region34: #{tpu_custom_call.1} parent=0
    _
  %s5 = ssub.s32 1, %s3
  %s6 = scalar_select 0, %s5, %s3
  $region1: #{tpu_custom_call.1} parent=0
    #allocation4 [shape = 'u8[8192]{0}', space=vmem, size = 0x2000, scoped, tag = 'input window, operand 0, single buffered']
    #allocation5 [shape = 's32[1]{0}', space=sflag, size = 0x4, scoped, tag = 'scoped memory for tpu_custom_call.1']
    #allocation6 [shape = 'u8[8192]{0}', space=vmem, size = 0x2000, scoped, tag = 'input window, operand 1, single buffered']
    #allocation7 [shape = 's32[1]{0}', space=sflag, size = 0x4, scoped, tag = 'scoped memory for tpu_custom_call.1']
    %7 = vsyncpa [#allocation5], 0
    %8 = vsyncpa [#allocation7], 0
    // Predicated region
    $region2: #{tpu_custom_call.1} parent=1 // pred_check
      _
    $region3: #{tpu_custom_call.1} parent=1 // pred_check_branch
      %10 = sbr.rel (0) target = $region5
    $region4: #{tpu_custom_call.1} parent=1 // pred_region
      %s12 = ssub.s32 256, 256
      %13 = vsyncadd [#allocation5], %s12
      %s15 = sshll.u32 [#allocation4], 4
      %s16 = int_to_ptr.vmem [resolvable:$true] %s15
      %18 = dma.hbm_to_vmem [thread:$0]  %s0, 256, %s16, [#allocation5]
    $region5: #{tpu_custom_call.1} parent=1 // pred_fallthru
      _
    // Predicated region
    $region6: #{tpu_custom_call.1} parent=1 // pred_check
      _
    $region7: #{tpu_custom_call.1} parent=1 // pred_check_branch
      %20 = sbr.rel (0) target = $region9
    $region8: #{tpu_custom_call.1} parent=1 // pred_region
      %s22 = ssub.s32 256, 256
      %23 = vsyncadd [#allocation7], %s22
      %s25 = sshll.u32 [#allocation6], 4
      %s26 = int_to_ptr.vmem [resolvable:$true] %s25
      %28 = dma.hbm_to_vmem [thread:$0]  %s1, 256, %s26, [#allocation7]
    $region9: #{tpu_custom_call.1} parent=1 // pred_fallthru
      _
    // Predicated region
    $region10: #{tpu_custom_call.1} parent=1 // pred_check
      _
    $region11: #{tpu_custom_call.1} parent=1 // pred_check_branch
      %30 = sbr.rel (0) target = $region13
    $region12: #{tpu_custom_call.1} parent=1 // pred_region
      %31 = dma.done [#allocation5], 256
    $region13: #{tpu_custom_call.1} parent=1 // pred_fallthru
      _
    // Predicated region
    $region14: #{tpu_custom_call.1} parent=1 // pred_check
      _
    $region15: #{tpu_custom_call.1} parent=1 // pred_check_branch
      %33 = sbr.rel (0) target = $region17
    $region16: #{tpu_custom_call.1} parent=1 // pred_region
      %34 = dma.done [#allocation7], 256
    $region17: #{tpu_custom_call.1} parent=1 // pred_fallthru
      _
    %p35 = scmp.eq.s32.totalorder 0, 0
    // Predicated region
    $region18: #{tpu_custom_call.1} parent=1 // pred_check
      %p36 = pneg %p35
    $region19: #{tpu_custom_call.1} parent=1 // pred_check_branch
      %38 = sbr.rel (%p36) target = $region21
    $region20: #{tpu_custom_call.1} parent=1 // pred_region
      %39 = vst [vmem:[#allocation2] sm:$0xff] 0.0
      %40 = vst [vmem:[#allocation3] sm:$0xff] 0.0
    $region21: #{tpu_custom_call.1} parent=1 // pred_fallthru
      _
    %v41 = vld [vmem:[#allocation4] sm:$0xff]
    %v42 = vmul.f32 %v41, 0.5
    %v43 = vtanh.pop %v42
    %v44 = vmul.f32 %v43, 0.5
    %v45 = vadd.f32 %v44, 0.5
    %v46 = vld [vmem:[#allocation6] sm:$0xff]
    %v47 = vld [vmem:[#allocation2] sm:$0xff]
    %v48 = vmul.f32 %v45, %v46
    %v49 = vadd.f32 %v47, %v48
    %50 = vst [vmem:[#allocation2] sm:$0xff] %v49
    %v51 = vld [vmem:[#allocation3] sm:$0xff]
    %v52 = vmul.f32 %v45, %v45
    %v53 = vadd.f32 %v52, %v46
    %v54 = vadd.f32 %v51, %v53
    %55 = vst [vmem:[#allocation3] sm:$0xff] %v54
    %v56 = vld [vmem:[#allocation4 + $0x8] sm:$0xff]
    %v57 = vmul.f32 %v56, 0.5
    %v58 = vtanh.pop %v57
    %v59 = vmul.f32 %v58, 0.5
    %v60 = vadd.f32 %v59, 0.5
    %v61 = vld [vmem:[#allocation6 + $0x8] sm:$0xff]
    %v62 = vld [vmem:[#allocation2] sm:$0xff]
    %v63 = vmul.f32 %v60, %v61
    %v64 = vadd.f32 %v62, %v63
    %65 = vst [vmem:[#allocation2] sm:$0xff] %v64
    %v66 = vld [vmem:[#allocation3] sm:$0xff]
    %v67 = vmul.f32 %v60, %v60
    %v68 = vadd.f32 %v67, %v61
    %v69 = vadd.f32 %v66, %v68
    %70 = vst [vmem:[#allocation3] sm:$0xff] %v69
    // Predicated region
    $region22: #{tpu_custom_call.1} parent=1 // pred_check
      %p71 = pneg %p35
    $region23: #{tpu_custom_call.1} parent=1 // pred_check_branch
      %73 = sbr.rel (%p71) target = $region25
    $region24: #{tpu_custom_call.1} parent=1 // pred_region
      %v74 = vld [vmem:[#allocation2] sm:$0xff]
      %75 = vadd.xlane.f32.xlu0 %v74
      %v76 = vpop.xlane.xlu0 %75
      %v77 = vld [vmem:[#allocation3] sm:$0xff]
      %78 = vadd.xlane.f32.xlu0 %v77
      %v79 = vpop.xlane.xlu0 %78
      %v80 = vmul.f32 %v76, 2.0
      %v81 = vadd.f32 %v80, 1e-05
      %v82 = vadd.f32 %v79, 1e-05
      %v83 = vrcp.pop %v82
      %v84 = vmul.f32 %v81, %v83
      %vm85 = vcmask 7168
      %86 = vst.msk [vmem:[%s2] sm:$0xff] %vm85, %v84
    $region25: #{tpu_custom_call.1} parent=1 // pred_fallthru
      _
    // Predicated region
    $region26: #{tpu_custom_call.1} parent=1 // pred_check
      _
    $region27: #{tpu_custom_call.1} parent=1 // pred_check_branch
      %88 = sbr.rel (0) target = $region29
    $region28: #{tpu_custom_call.1} parent=1 // pred_region
      _
    $region29: #{tpu_custom_call.1} parent=1 // pred_fallthru
      _
    // Predicated region
    $region30: #{tpu_custom_call.1} parent=1 // pred_check
      _
    $region31: #{tpu_custom_call.1} parent=1 // pred_check_branch
      %90 = sbr.rel (0) target = $region33
    $region32: #{tpu_custom_call.1} parent=1 // pred_region
      _
    $region33: #{tpu_custom_call.1} parent=1 // pred_fallthru
      _
    %91 = vsyncpa [#allocation5], 1
    %92 = vsyncpa [#allocation7], 1

</llo_original>
